<compile_context>
chip_gen: v5e
topology: v5e:2x2
jax: 0.10.0
libtpu: 0.0.40
codegen_flags: <defaults>
</compile_context>

<pallas_src>
import functools
import math

import jax
import jax.numpy as jnp
from jax.experimental import pallas as pl
from jax.experimental.pallas import tpu as pltpu

BN_EPS = 1e-5
BN_SCALE = 1.0 / math.sqrt(1.0 + BN_EPS)   # BN with gamma=1, beta=0, mean=0, var=1
_LPAD = 8                                  # sublane-aligned interior offset in dw scratches


# --------------------------------------------------------------------------
# Fused bf16 matmul kernel:  y = relu6?( x @ w (+ bias) (+ residual) )
# BN scale is pre-folded into w; bias/residual are optional extra operands.
# --------------------------------------------------------------------------

def _matmul_kernel(x_ref, w_ref, *rest, relu6):
    o_ref = rest[-1]
    y = jnp.dot(x_ref[...], w_ref[...], preferred_element_type=jnp.float32)
    for extra in rest[:-1]:                      # optional bias (1,tn) / residual (tm,tn)
        y = y + extra[...].astype(jnp.float32)
    if relu6:
        y = jnp.clip(y, 0.0, 6.0)
    o_ref[...] = y.astype(o_ref.dtype)


def matmul_fused(x, w, *, relu6, bias=None, res=None, out_dtype=jnp.bfloat16):
    M, K = x.shape
    N = w.shape[1]
    x = x.astype(jnp.bfloat16)
    w = w.astype(jnp.bfloat16)

    # Fixed MXU-friendly tiles; ragged edges handled by pl.cdiv grids (OOB rows/cols of
    # the last block are masked on store), so M like NT*7*7 never degrades to tm=8.
    tm = 256 if M >= 256 else M
    if N % 256 == 0:
        tn = 256
    elif N % 128 == 0:
        tn = 128
    elif N > 256:
        tn = 256
    else:
        tn = N

    extras = []
    extra_specs = []
    if bias is not None:
        extras.append(bias.reshape(1, N).astype(jnp.float32))
        extra_specs.append(pl.BlockSpec((1, tn), lambda i, j: (0, j)))
    if res is not None:
        extras.append(res.astype(jnp.bfloat16))
        extra_specs.append(pl.BlockSpec((tm, tn), lambda i, j: (i, j)))

    return pl.pallas_call(
        functools.partial(_matmul_kernel, relu6=relu6),
        out_shape=jax.ShapeDtypeStruct((M, N), out_dtype),
        grid=(pl.cdiv(M, tm), pl.cdiv(N, tn)),
        in_specs=[pl.BlockSpec((tm, K), lambda i, j: (i, 0)),
                  pl.BlockSpec((K, tn), lambda i, j: (0, j))] + extra_specs,
        out_specs=pl.BlockSpec((tm, tn), lambda i, j: (i, j)),
        compiler_params=pltpu.CompilerParams(
            dimension_semantics=("parallel", "parallel")),
    )(x, w, *extras)


# --------------------------------------------------------------------------
# Depthwise 3x3 conv (+ folded BN + ReLU6)
# --------------------------------------------------------------------------

def _dw3x3_s1_kernel(x_ref, w_ref, o_ref, xp_ref):
    # Stride 1: bf16 zero-halo scratch in VMEM.  Only the halo cells that are actually
    # read (rows 0 / H+1 and the two sublane columns) are zeroed, and they are re-zeroed
    # every step so the kernel stays correct when the N grid axis is megacore-sharded
    # (a pl.when(program_id==0) guard would leave the other core's scratch garbage).
    H, W, C = o_ref.shape[1], o_ref.shape[2], o_ref.shape[3]
    xp_ref[0:1, :, :] = jnp.zeros((1, W + _LPAD + 1, C), xp_ref.dtype)
    xp_ref[H + 1:H + 2, :, :] = jnp.zeros((1, W + _LPAD + 1, C), xp_ref.dtype)
    xp_ref[1:H + 1, _LPAD - 1:_LPAD, :] = jnp.zeros((H, 1, C), xp_ref.dtype)
    xp_ref[1:H + 1, _LPAD + W:_LPAD + W + 1, :] = jnp.zeros((H, 1, C), xp_ref.dtype)
    xp_ref[1:H + 1, _LPAD:_LPAD + W, :] = x_ref[0]

    w = w_ref[...]
    acc = jnp.zeros((H, W, C), jnp.float32)
    for kh in range(3):
        for kw in range(3):
            # taps read straight from the scratch ref (no materialize + value slices)
            tap = xp_ref[kh:kh + H, _LPAD - 1 + kw:_LPAD - 1 + kw + W, :]
            acc = acc + tap.astype(jnp.float32) * w[kh, kw]
    o_ref[0] = jnp.clip(acc, 0.0, 6.0).astype(o_ref.dtype)


def _dw3x3_s2_kernel(x_ref, w_ref, o_ref, ps_ref):
    # Stride 2: the input block is (1, Ho, 2, Wo, 2C) -- the W-parity is folded into the
    # lane dimension by a free row-major reshape in the wrapper, so the four (row,col)
    # parity planes are plain leading-dim / lane slices of a single HBM read.
    Ho, Wo, C = o_ref.shape[1], o_ref.shape[2], o_ref.shape[3]
    v = x_ref[0]                        # (Ho, 2, Wo, 2C) bf16
    q00 = v[:, 0, :, 0:C]               # x[0::2, 0::2, :]
    q01 = v[:, 0, :, C:2 * C]           # x[0::2, 1::2, :]
    q10 = v[:, 1, :, 0:C]               # x[1::2, 0::2, :]
    q11 = v[:, 1, :, 0 + C:2 * C]       # x[1::2, 1::2, :]

    # Small shift scratch (top-row / left-column zero halo); halo re-zeroed each step.
    for p in range(3):
        ps_ref[p, 0:1, :, :] = jnp.zeros((1, Wo + _LPAD, C), ps_ref.dtype)
        ps_ref[p, :, _LPAD - 1:_LPAD, :] = jnp.zeros((Ho + 1, 1, C), ps_ref.dtype)
    ps_ref[0, 1:Ho + 1, _LPAD:_LPAD + Wo, :] = q01
    ps_ref[1, 1:Ho + 1, _LPAD:_LPAD + Wo, :] = q10
    ps_ref[2, 1:Ho + 1, _LPAD:_LPAD + Wo, :] = q11

    w = w_ref[...]
    f = jnp.float32
    # tap(kh,kw) = x[2oh+kh-1, 2ow+kw-1]
    acc = (q00.astype(f) * w[1, 1] + q01.astype(f) * w[1, 2]
           + q10.astype(f) * w[2, 1] + q11.astype(f) * w[2, 2])
    acc = acc + ps_ref[0, 1:Ho + 1, _LPAD - 1:_LPAD - 1 + Wo, :].astype(f) * w[1, 0]  # q01[oh, ow-1]
    acc = acc + ps_ref[1, 0:Ho, _LPAD:_LPAD + Wo, :].astype(f) * w[0, 1]              # q10[oh-1, ow]
    acc = acc + ps_ref[2, 0:Ho, _LPAD:_LPAD + Wo, :].astype(f) * w[0, 2]              # q11[oh-1, ow]
    acc = acc + ps_ref[2, 1:Ho + 1, _LPAD - 1:_LPAD - 1 + Wo, :].astype(f) * w[2, 0]  # q11[oh, ow-1]
    acc = acc + ps_ref[2, 0:Ho, _LPAD - 1:_LPAD - 1 + Wo, :].astype(f) * w[0, 0]      # q11[oh-1, ow-1]
    o_ref[0] = jnp.clip(acc, 0.0, 6.0).astype(o_ref.dtype)


def depthwise3x3_bn_relu6(x, w, stride):
    N, H, W, C = x.shape
    if stride == 1:
        return pl.pallas_call(
            _dw3x3_s1_kernel,
            out_shape=jax.ShapeDtypeStruct((N, H, W, C), jnp.bfloat16),
            grid=(N,),
            in_specs=[pl.BlockSpec((1, H, W, C), lambda n: (n, 0, 0, 0)),
                      pl.BlockSpec((3, 3, C), lambda n: (0, 0, 0))],
            out_specs=pl.BlockSpec((1, H, W, C), lambda n: (n, 0, 0, 0)),
            scratch_shapes=[pltpu.VMEM((H + 2, W + _LPAD + 1, C), jnp.bfloat16)],
            compiler_params=pltpu.CompilerParams(dimension_semantics=("parallel",)),
        )(x, w)

    # stride 2: fold W-parity into lanes (free row-major reshape, no HBM pad/planes).
    Ho, Wo = H // 2, W // 2
    xr = x.reshape(N, Ho, 2, Wo, 2 * C)
    return pl.pallas_call(
        _dw3x3_s2_kernel,
        out_shape=jax.ShapeDtypeStruct((N, Ho, Wo, C), jnp.bfloat16),
        grid=(N,),
        in_specs=[pl.BlockSpec((1, Ho, 2, Wo, 2 * C), lambda n: (n, 0, 0, 0, 0)),
                  pl.BlockSpec((3, 3, C), lambda n: (0, 0, 0))],
        out_specs=pl.BlockSpec((1, Ho, Wo, C), lambda n: (n, 0, 0, 0)),
        scratch_shapes=[pltpu.VMEM((3, Ho + 1, Wo + _LPAD, C), jnp.bfloat16)],
        compiler_params=pltpu.CompilerParams(dimension_semantics=("parallel",)),
    )(xr, w)


# --------------------------------------------------------------------------
# Temporal shift: single (1, T, HW, C) read per batch element, dense full-lane writes.
# --------------------------------------------------------------------------

def _tsm_shift_kernel(x_ref, o_ref, *, fold):
    T, HW, C = x_ref.shape[1], x_ref.shape[2], x_ref.shape[3]
    ch = jax.lax.broadcasted_iota(jnp.int32, (HW, C), 1)
    zero = jnp.zeros((HW, C), o_ref.dtype)
    for t in range(T):                                   # T is small & static; unrolled
        cur = x_ref[0, t]
        nxt = x_ref[0, t + 1] if t + 1 < T else zero     # out[:, :-1, :fold]     = x[:, 1:]
        prv = x_ref[0, t - 1] if t >= 1 else zero        # out[:, 1:, fold:2fold] = x[:, :-1]
        o_ref[0, t] = jnp.where(ch < fold, nxt,
                                jnp.where(ch < 2 * fold, prv, cur))


def temporal_shift(x, n_segment, fold_div):
    NT, H, W, C = x.shape
    T = n_segment
    B = NT // T
    HW = H * W
    fold = C // fold_div
    xr = x.reshape(B, T, HW, C)
    out = pl.pallas_call(
        functools.partial(_tsm_shift_kernel, fold=fold),
        out_shape=jax.ShapeDtypeStruct(xr.shape, xr.dtype),
        grid=(B,),
        in_specs=[pl.BlockSpec((1, T, HW, C), lambda b: (b, 0, 0, 0))],
        out_specs=pl.BlockSpec((1, T, HW, C), lambda b: (b, 0, 0, 0)),
        compiler_params=pltpu.CompilerParams(dimension_semantics=("parallel",)),
    )(xr)
    return out.reshape(NT, H, W, C)


# --------------------------------------------------------------------------
# Global average pool and avg consensus (gridded over the leading axis)
# --------------------------------------------------------------------------

def _gap_kernel(x_ref, o_ref):
    o_ref[...] = jnp.mean(x_ref[...].astype(jnp.float32), axis=(1, 2))


def global_avg_pool(x):
    N, H, W, C = x.shape
    return pl.pallas_call(
        _gap_kernel,
        out_shape=jax.ShapeDtypeStruct((N, C), jnp.float32),
        grid=(N,),
        in_specs=[pl.BlockSpec((1, H, W, C), lambda n: (n, 0, 0, 0))],
        out_specs=pl.BlockSpec((1, C), lambda n: (n, 0)),
        compiler_params=pltpu.CompilerParams(dimension_semantics=("parallel",)),
    )(x)


def _consensus_kernel(x_ref, o_ref):
    o_ref[...] = jnp.mean(x_ref[...], axis=1)


def consensus_avg(x):
    # SegmentConsensus('avg', dim=1) + squeeze(1)
    B, T, K = x.shape
    return pl.pallas_call(
        _consensus_kernel,
        out_shape=jax.ShapeDtypeStruct((B, K), x.dtype),
        grid=(B,),
        in_specs=[pl.BlockSpec((1, T, K), lambda b: (b, 0, 0))],
        out_specs=pl.BlockSpec((1, K), lambda b: (b, 0)),
        compiler_params=pltpu.CompilerParams(dimension_semantics=("parallel",)),
    )(x)


# --------------------------------------------------------------------------
# Parameter construction (deterministic, mirroring MobileNetV2._initialize_weights
# std's; BN affine with identity running stats is folded into the conv weights;
# matmul weights are stored in bf16, depthwise weights in f32; new_fc std=0.001)
# --------------------------------------------------------------------------

def _normal(key, shape, std):
    return std * jax.random.normal(key, shape, dtype=jnp.float32)


def build_tsm_mobilenetv2_params(key, num_class):
    keys = iter(jax.random.split(key, 64))
    params = {}
    # stem: Conv2d(3, 32, 3, stride=2, pad=1), weight as (kh*kw*Cin, Cout)
    params["stem_w"] = (
        _normal(next(keys), (3 * 3 * 3, 32), math.sqrt(2.0 / (3 * 3 * 32))) * BN_SCALE
    ).astype(jnp.bfloat16)

    settings = [[1, 16, 1, 1], [6, 24, 2, 2], [6, 32, 3, 2], [6, 64, 4, 2],
                [6, 96, 3, 1], [6, 160, 3, 2], [6, 320, 1, 1]]
    blocks = []
    inp = 32
    for t, c, n, s in settings:
        oup = int(math.ceil(c / 8.0) * 8) if t > 1 else c   # make_divisible (width_mult=1)
        for i in range(n):
            stride = s if i == 0 else 1
            hid = inp * t
            blk = {
                "t": t, "inp": inp, "oup": oup, "stride": stride,
                "use_res": (stride == 1 and inp == oup),
                # TSM inserts the shift on conv[0] of InvertedResiduals with
                # len(conv)==8 (expand_ratio != 1) and use_res_connect == True.
                "shift": (t != 1 and stride == 1 and inp == oup),
            }
            if t != 1:
                blk["expand_w"] = (
                    _normal(next(keys), (inp, hid), math.sqrt(2.0 / hid)) * BN_SCALE
                ).astype(jnp.bfloat16)
            blk["dw_w"] = _normal(next(keys), (3, 3, hid),
                                  math.sqrt(2.0 / (9 * hid))) * BN_SCALE   # f32 (VPU math)
            blk["proj_w"] = (
                _normal(next(keys), (hid, oup), math.sqrt(2.0 / oup)) * BN_SCALE
            ).astype(jnp.bfloat16)
            blocks.append(blk)
            inp = oup
    params["blocks"] = blocks
    # conv_1x1_bn(320, 1280)
    params["head_w"] = (
        _normal(next(keys), (inp, 1280), math.sqrt(2.0 / 1280)) * BN_SCALE
    ).astype(jnp.bfloat16)
    # new_fc = Linear(1280, num_class), init normal(0, 0.001), bias 0
    params["fc_w"] = _normal(next(keys), (1280, num_class), 0.001).astype(jnp.bfloat16)
    params["fc_b"] = jnp.zeros((1, num_class), jnp.float32)
    return params


# --------------------------------------------------------------------------
# Forward pass (TSM with mobilenetv2 base model, avg consensus, dropout>0 path)
# --------------------------------------------------------------------------

def conv1x1_bn(x, w, *, relu6, res=None):
    N, H, W, Cin = x.shape
    Cout = w.shape[1]
    r = None if res is None else res.reshape(N * H * W, res.shape[-1])
    y = matmul_fused(x.reshape(N * H * W, Cin), w, relu6=relu6, res=r)
    return y.reshape(N, H, W, Cout)


def stem_conv_bn_relu6(x, w):
    # Conv2d(3, 32, 3, stride=2, pad=1) via bf16 im2col + fused Pallas matmul (+BN+ReLU6).
    N, H, W, C = x.shape
    Ho, Wo = H // 2, W // 2
    x = x.astype(jnp.bfloat16)                         # halve im2col HBM traffic
    xp = jnp.pad(x, ((0, 0), (1, 1), (1, 1), (0, 0)))
    patches = [xp[:, kh:kh + 2 * Ho:2, kw:kw + 2 * Wo:2, :]
               for kh in range(3) for kw in range(3)]
    p = jnp.stack(patches, axis=3).reshape(N * Ho * Wo, 9 * C)   # (kh, kw, c) ordering
    Cout = w.shape[1]
    y = matmul_fused(p, w, relu6=True)
    return y.reshape(N, Ho, Wo, Cout)


def inverted_residual_forward(x, blk, n_segment, shift_div):
    h = x
    if blk["t"] != 1:
        if blk["shift"]:
            h = temporal_shift(h, n_segment, shift_div)
        h = conv1x1_bn(h, blk["expand_w"], relu6=True)
    h = depthwise3x3_bn_relu6(h, blk["dw_w"], blk["stride"])
    # projection 1x1 (+BN, no ReLU); the residual add is fused into the same kernel.
    res = x if blk["use_res"] else None
    return conv1x1_bn(h, blk["proj_w"], relu6=False, res=res)


def tsm_forward(params, x_bcthw, num_segments, shift_div, num_class):
    B, C, T, H, W = x_bcthw.shape
    # input.permute(0, 2, 1, 3, 4).reshape(B*T, C, H, W), then NCHW -> NHWC
    x = jnp.transpose(x_bcthw, (0, 2, 1, 3, 4)).reshape(B * T, C, H, W)
    x = jnp.transpose(x, (0, 2, 3, 1))

    x = stem_conv_bn_relu6(x, params["stem_w"])
    for blk in params["blocks"]:
        x = inverted_residual_forward(x, blk, num_segments, shift_div)
    x = conv1x1_bn(x, params["head_w"], relu6=True)

    feat = global_avg_pool(x)                       # x.mean(3).mean(2) -> (B*T, 1280) f32
    # base_model.classifier was replaced by nn.Dropout(0.8) -> identity in eval mode.
    logits = matmul_fused(feat, params["fc_w"], relu6=False,
                          bias=params["fc_b"], out_dtype=jnp.float32)
    logits = logits.reshape(B, num_segments, num_class)
    return consensus_avg(logits)                    # avg consensus + squeeze(1)


# --------------------------------------------------------------------------

if __name__ == "__main__":
    B, C, T, H, W = 2, 3, 4, 32, 32          # input_size % 32 == 0 as MobileNetV2 requires
    num_class = 10
    num_segments = T
    shift_div = 8

    key = jax.random.PRNGKey(0)
    pkey, xkey = jax.random.split(key)
    params = build_tsm_mobilenetv2_params(pkey, num_class)
    x = jax.random.normal(xkey, (B, C, T, H, W), dtype=jnp.float32)

    out = tsm_forward(params, x, num_segments, shift_div, num_class)
    out = jax.block_until_ready(out)
    assert out.shape == (B, num_class), out.shape
    assert bool(jnp.all(jnp.isfinite(out)))
    print("KERNEL_OK")
</pallas_src>

<mosaic_0001>
module attributes {stable_mosaic.version = 11 : i64} {
  func.func @_matmul_kernel(%arg0: i32, %arg1: i32, %arg2: memref<256x27xbf16, #tpu.memory_space<vmem>>, %arg3: memref<27x32xbf16, #tpu.memory_space<vmem>>, %arg4: memref<256x32xbf16, #tpu.memory_space<vmem>>) attributes {dimension_semantics = [#tpu.dimension_semantics<parallel>, #tpu.dimension_semantics<parallel>], iteration_bounds = array<i64: 8, 1>, scalar_prefetch = 0 : i64, scratch_operands = 0 : i64, tpu.core_type = #tpu.core_type<tc>, window_params = [{transform_indices = @transform_0, window_bounds = array<i64: 256, 27>}, {transform_indices = @transform_1, window_bounds = array<i64: 27, 32>}, {transform_indices = @transform_2, window_bounds = array<i64: 256, 32>}]} {
    %c0 = arith.constant 0 : index
    %c0_0 = arith.constant 0 : index
    %0 = vector.load %arg2[%c0, %c0_0] : memref<256x27xbf16, #tpu.memory_space<vmem>>, vector<256x27xbf16>
    %c0_1 = arith.constant 0 : index
    %c0_2 = arith.constant 0 : index
    %1 = vector.load %arg3[%c0_1, %c0_2] : memref<27x32xbf16, #tpu.memory_space<vmem>>, vector<27x32xbf16>
    %cst = arith.constant dense<0.000000e+00> : vector<256x32xf32>
    %2 = tpu.matmul %0, %1, %cst {dimension_numbers = #tpu.dot_dimension_numbers<[1], [0], [0], [1], [0, 0, 1, 1], [], []>} : vector<256x27xbf16>, vector<27x32xbf16>, vector<256x32xf32> -> vector<256x32xf32>
    %cst_3 = arith.constant 0.000000e+00 : f32
    %cst_4 = arith.constant 6.000000e+00 : f32
    %3 = vector.broadcast %cst_3 : f32 to vector<256x32xf32>
    %4 = arith.maximumf %3, %2 : vector<256x32xf32>
    %5 = vector.broadcast %cst_4 : f32 to vector<256x32xf32>
    %6 = arith.minimumf %5, %4 : vector<256x32xf32>
    %7 = arith.truncf %6 : vector<256x32xf32> to vector<256x32xbf16>
    %c0_5 = arith.constant 0 : index
    %c0_6 = arith.constant 0 : index
    %8 = vector.load %arg4[%c0_5, %c0_6] : memref<256x32xbf16, #tpu.memory_space<vmem>>, vector<256x32xbf16>
    tpu.vector_store %arg4[%c0_5, %c0_6], %7 {strides = array<i32>} : memref<256x32xbf16, #tpu.memory_space<vmem>>, vector<256x32xbf16>,
    return
  }
  func.func @transform_0(%arg0: i32, %arg1: i32) -> (i32, i32) {
    %c0_i32 = arith.constant 0 : i32
    %c0_i32_0 = arith.constant 0 : i32
    return %arg0, %c0_i32 : i32, i32
  }
  func.func @transform_1(%arg0: i32, %arg1: i32) -> (i32, i32) {
    %c0_i32 = arith.constant 0 : i32
    %c0_i32_0 = arith.constant 0 : i32
    return %c0_i32, %arg1 : i32, i32
  }
  func.func @transform_2(%arg0: i32, %arg1: i32) -> (i32, i32) {
    %c0_i32 = arith.constant 0 : i32
    return %arg0, %arg1 : i32, i32
  }
}

</mosaic_0001>

<llo_original>
// kernel: tpu_custom_call.1
$region0: #{tpu_custom_call.1}
  #allocation0 [shape = 'u32[]', space=smem, size = 0x4, offset = 0x4, fixed_abs, tag = 'smem constant byte address 0x4 - core index']
  #allocation1 [shape = 'u32[72,128]{1,0:T(1,128)}', space=vmem, size = 0x9000, scoped, tag = 'internal scratch']
  %s0 = inlined_call_operand.vmem [shape: bf16[2048,27], index: 0, kind: input, shape index: {}]
  %s1 = inlined_call_operand.vmem [shape: bf16[27,32], index: 1, kind: input, shape index: {}]
  %s2 = inlined_call_operand.vmem [shape: bf16[2048,32], index: 2, kind: output, shape index: {}]
  %s3 = sld [smem:[#allocation0]]
  $region41: #{tpu_custom_call.1} parent=0
    _
  %s5 = ssub.s32 1, %s3
  %s6 = scalar_select 0, %s5, %s3
  loop: start=0, step=1, limit=10
  $region2: #{tpu_custom_call.1} parent=0 // loop_pre_header
    _
  $region3: #{tpu_custom_call.1} parent=0 // loop_header
    %s8 = sphi 0, %s12
    %p9 = scmp.ge.s32.totalorder %s8, 10
    %s15 = sphi 0, %s27
    %s16 = sphi 0, %s23
    %s17 = sphi 0, %s15
    %s18 = sphi 0, %s16
    %s19 = sphi 0, %s17
    %s20 = sphi 0, %s18
    %s30 = sphi 0, %s32
    %s33 = sphi 0, %s30
    %s34 = sphi 0, %s33
    %s50 = sphi 0, %s34
    %s56 = sphi 0, %s58
    %s59 = sphi 0, %s56
    %s60 = sphi 0, %s59
    %s76 = sphi 0, %s60
    %s84 = sphi 0, %s86
    %s87 = sphi 0, %s84
    %s88 = sphi 0, %s87
    %s104 = sphi 0, %s88
  $region4: #{tpu_custom_call.1} parent=0 // loop_header_branch
    %11 = sbr.rel (%p9) target = $region8
  $region5: #{tpu_custom_call.1} parent=0 // loop_body
    %s13 = ssub.s32 %s8, 1
    %s14 = ssub.s32 %s8, 2
    %s21 = sadd.s32 1, %s16
    %p22 = scmp.ge.s32.totalorder %s21, 1
    %s23 = scalar_select %p22, 0, %s21
    %s24 = sadd.s32 1, %s15
    %s25 = scalar_select %p22, %s24, %s15
    %p26 = scmp.ge.s32.totalorder %s25, 8
    %s27 = scalar_select %p26, 0, %s25
    %s28 = ssub.s32 %s15, %s27
    %p29 = scmp.eq.s32.totalorder %s28, 0
    %s31 = sadd.s32 %s30, 1
    %s32 = scalar_select %p29, %s30, %s31
    %p35 = pneg %p29
    %p36 = scmp.eq.s32.totalorder %s8, 7
    %p37 = por %p35, %p36
    %p38 = scmp.ne.s32.totalorder %s30, %s33
    %p39 = scmp.eq.s32.totalorder %s8, 0
    %p40 = por %p38, %p39
    %p41 = scmp.ne.s32.totalorder %s30, %s33
    %p42 = scmp.eq.s32.totalorder %s13, 7
    %p43 = por %p41, %p42
    %p44 = scmp.ne.s32.totalorder %s33, %s34
    %p45 = scmp.eq.s32.totalorder %s13, 0
    %p46 = por %p44, %p45
    %p47 = scmp.ne.s32.totalorder %s33, %s34
    %p48 = scmp.eq.s32.totalorder %s14, 7
    %p49 = por %p47, %p48
    %p51 = scmp.ne.s32.totalorder %s34, %s50
    %p52 = scmp.eq.s32.totalorder %s14, 0
    %p53 = por %p51, %p52
    %s54 = ssub.s32 %s16, %s23
    %p55 = scmp.eq.s32.totalorder %s54, 0
    %s57 = sadd.s32 %s56, 1
    %s58 = scalar_select %p55, %s56, %s57
    %p61 = pneg %p55
    %p62 = scmp.eq.s32.totalorder %s8, 7
    %p63 = por %p61, %p62
    %p64 = scmp.ne.s32.totalorder %s56, %s59
    %p65 = scmp.eq.s32.totalorder %s8, 0
    %p66 = por %p64, %p65
    %p67 = scmp.ne.s32.totalorder %s56, %s59
    %p68 = scmp.eq.s32.totalorder %s13, 7
    %p69 = por %p67, %p68
    %p70 = scmp.ne.s32.totalorder %s59, %s60
    %p71 = scmp.eq.s32.totalorder %s13, 0
    %p72 = por %p70, %p71
    %p73 = scmp.ne.s32.totalorder %s59, %s60
    %p74 = scmp.eq.s32.totalorder %s14, 7
    %p75 = por %p73, %p74
    %p77 = scmp.ne.s32.totalorder %s60, %s76
    %p78 = scmp.eq.s32.totalorder %s14, 0
    %p79 = por %p77, %p78
    %s80 = ssub.s32 %s15, %s27
    %s81 = ssub.s32 %s16, %s23
    %s82 = sor.u32 %s80, %s81
    %p83 = scmp.eq.s32.totalorder %s82, 0
    %s85 = sadd.s32 %s84, 1
    %s86 = scalar_select %p83, %s84, %s85
    %p89 = pneg %p83
    %p90 = scmp.eq.s32.totalorder %s8, 7
    %p91 = por %p89, %p90
    %p92 = scmp.ne.s32.totalorder %s84, %s87
    %p93 = scmp.eq.s32.totalorder %s8, 0
    %p94 = por %p92, %p93
    %p95 = scmp.ne.s32.totalorder %s84, %s87
    %p96 = scmp.eq.s32.totalorder %s13, 7
    %p97 = por %p95, %p96
    %p98 = scmp.ne.s32.totalorder %s87, %s88
    %p99 = scmp.eq.s32.totalorder %s13, 0
    %p100 = por %p98, %p99
    %p101 = scmp.ne.s32.totalorder %s87, %s88
    %p102 = scmp.eq.s32.totalorder %s14, 7
    %p103 = por %p101, %p102
    %p105 = scmp.ne.s32.totalorder %s88, %s104
    %p106 = scmp.eq.s32.totalorder %s14, 0
    %p107 = por %p105, %p106
    %p108 = scmp.le.s32.totalorder 1, %s8
    %p109 = scmp.lt.s32.totalorder %s8, 9
    %p110 = pnand %p108, %p109
    %p111 = pneg %p110
    // Predicated region
    $region9: #{tpu_custom_call.1} parent=5 // pred_check
      _
    $region10: #{tpu_custom_call.1} parent=5 // pred_check_branch
      %113 = sbr.rel (%p110) target = $region12
    $region11: #{tpu_custom_call.1} parent=5 // pred_region
      %s114 = ssub.s32 %s8, 1
      // Predicated region
      $region13: #{tpu_custom_call.1} parent=11 // pred_check
        %p115 = pneg %p72
      $region14: #{tpu_custom_call.1} parent=11 // pred_check_branch
        %117 = sbr.rel (%p115) target = $region16
      $region15: #{tpu_custom_call.1} parent=11 // pred_region
        %p118 = scmp.lt.s32.totalorder %s18, 0
        %s119 = scalar_select %p118, %s18, 0
        %s120 = smul.addr %s119, 4
        %s121 = scalar_lea.vmem %s1, %s120
      $region16: #{tpu_custom_call.1} parent=11 // pred_fallthru
        _
    $region12: #{tpu_custom_call.1} parent=5 // pred_fallthru
      _
    %p122 = scmp.lt.s32.totalorder %s8, 8
    // Predicated region
    $region17: #{tpu_custom_call.1} parent=5 // pred_check
      %p123 = pneg %p122
    $region18: #{tpu_custom_call.1} parent=5 // pred_check_branch
      %125 = sbr.rel (%p123) target = $region20
    $region19: #{tpu_custom_call.1} parent=5 // pred_region
      // Predicated region
      $region21: #{tpu_custom_call.1} parent=19 // pred_check
        %p126 = pneg %p40
      $region22: #{tpu_custom_call.1} parent=19 // pred_check_branch
        %128 = sbr.rel (%p126) target = $region24
      $region23: #{tpu_custom_call.1} parent=19 // pred_region
        %s129 = smul.u32 32, %s15
        %p130 = scmp.lt.s32.totalorder %s129, 255
        %s131 = scalar_select %p130, %s129, 255
        %s132 = smul.addr %s131, 4
        %s133 = scalar_lea.vmem %s0, %s132
        %s134 = smul.u32 32, %s15
      $region24: #{tpu_custom_call.1} parent=19 // pred_fallthru
        _
    $region20: #{tpu_custom_call.1} parent=5 // pred_fallthru
      _
    %p135 = scmp.le.s32.totalorder 1, %s8
    %p136 = scmp.lt.s32.totalorder %s8, 9
    %p137 = pnand %p135, %p136
    %p138 = pneg %p137
    // Predicated region
    $region25: #{tpu_custom_call.1} parent=5 // pred_check
      _
    $region26: #{tpu_custom_call.1} parent=5 // pred_check_branch
      %140 = sbr.rel (%p137) target = $region28
    $region27: #{tpu_custom_call.1} parent=5 // pred_region
      %s141 = ssub.s32 %s8, 1
      %s142 = smul.u32 32, %s17
      %p143 = scmp.lt.s32.totalorder %s142, 255
      %s144 = scalar_select %p143, %s142, 255
      %s145 = smul.addr %s144, 4
      %s146 = scalar_lea.vmem %s0, %s145
      %p147 = pneg %p46
      %p148 = pneg %p43
      %p149 = scmp.lt.s32.totalorder %s18, 0
      %s150 = scalar_select %p149, %s18, 0
      %s151 = smul.addr %s150, 4
      %s152 = scalar_lea.vmem %s1, %s151
      %p153 = pneg %p72
      %p154 = pneg %p69
      %p155 = pneg %p100
      %p156 = pneg %p97
      %s157 = smul.u32 32, %s17
      %p158 = scmp.lt.s32.totalorder %s157, 255
      %s159 = scalar_select %p158, %s157, 255
      %p160 = scmp.lt.s32.totalorder %s18, 0
      %s161 = scalar_select %p160, %s18, 0
      %s162 = sadd.s32 %s161, %s159
      %s163 = smul.addr %s162, 4
      %s164 = scalar_lea.vmem %s2, %s163
      %s165 = smul.u32 32, %s17
      %p166 = scmp.lt.s32.totalorder %s165, 255
      %s167 = scalar_select %p166, %s165, 255
      %s168 = smul.addr %s167, 4
      %s169 = scalar_lea.vmem %s0, %s168
      %s170 = smul.u32 32, %s17
      %p171 = scmp.lt.s32.totalorder %s18, 0
      %s172 = scalar_select %p171, %s18, 0
      %s173 = smul.addr %s172, 4
      %s174 = scalar_lea.vmem %s1, %s173
      %s175 = smul.u32 32, %s17
      %p176 = scmp.lt.s32.totalorder %s175, 255
      %s177 = scalar_select %p176, %s175, 255
      %p178 = scmp.lt.s32.totalorder %s18, 0
      %s179 = scalar_select %p178, %s18, 0
      %s180 = sadd.s32 %s179, %s177
      %s181 = smul.addr %s180, 4
      %s182 = scalar_lea.vmem %s2, %s181
      %s183 = smul.u32 32, %s17
      %v185 = vld [vmem:[%s169] sm:$0xf]
      %v186 = vld [vmem:[%s169 + $0x4] sm:$0xf]
      %v187 = vld [vmem:[%s169 + $0x8] sm:$0xf]
      %v188 = vld [vmem:[%s169 + $0xc] sm:$0xf]
      %v189 = vld [vmem:[%s169 + $0x10] sm:$0xf]
      %v190 = vld [vmem:[%s169 + $0x14] sm:$0xf]
      %v191 = vld [vmem:[%s169 + $0x18] sm:$0xf]
      %v192 = vld [vmem:[%s169 + $0x1c] sm:$0xf]
      %v193 = vld [vmem:[%s169 + $0x20] sm:$0xf]
      %v194 = vld [vmem:[%s169 + $0x24] sm:$0xf]
      %v195 = vld [vmem:[%s169 + $0x28] sm:$0xf]
      %v196 = vld [vmem:[%s169 + $0x2c] sm:$0xf]
      %v197 = vld [vmem:[%s169 + $0x30] sm:$0xf]
      %v198 = vld [vmem:[%s169 + $0x34] sm:$0xf]
      %v199 = vld [vmem:[%s169 + $0x38] sm:$0xf]
      %v200 = vld [vmem:[%s169 + $0x3c] sm:$0xf]
      %v201 = vld [vmem:[%s169 + $0x40] sm:$0xf]
      %v202 = vld [vmem:[%s169 + $0x44] sm:$0xf]
      %v203 = vld [vmem:[%s169 + $0x48] sm:$0xf]
      %v204 = vld [vmem:[%s169 + $0x4c] sm:$0xf]
      %v205 = vld [vmem:[%s169 + $0x50] sm:$0xf]
      %v206 = vld [vmem:[%s169 + $0x54] sm:$0xf]
      %v207 = vld [vmem:[%s169 + $0x58] sm:$0xf]
      %v208 = vld [vmem:[%s169 + $0x5c] sm:$0xf]
      %v209 = vld [vmem:[%s169 + $0x60] sm:$0xf]
      %v210 = vld [vmem:[%s169 + $0x64] sm:$0xf]
      %v211 = vld [vmem:[%s169 + $0x68] sm:$0xf]
      %v212 = vld [vmem:[%s169 + $0x6c] sm:$0xf]
      %v213 = vld [vmem:[%s169 + $0x70] sm:$0xf]
      %v214 = vld [vmem:[%s169 + $0x74] sm:$0xf]
      %v215 = vld [vmem:[%s169 + $0x78] sm:$0xf]
      %v216 = vld [vmem:[%s169 + $0x7c] sm:$0xf]
      %v217 = vld [vmem:[%s174] sm:$0xf]
      %v218 = vld [vmem:[%s174 + $0x4] sm:$0xf]
      %v219 = vld [vmem:[%s174 + $0x8] sm:$0xf]
      %v220 = vld [vmem:[%s174 + $0xc] sm:$0x3]
      %v253 = vunpack.c.l.b16 %v185
      %v254 = vunpack.c.l.b16 %v186
      %v255 = vunpack.c.l.b16 %v187
      %v256 = vunpack.c.l.b16 %v188
      %v257 = vunpack.c.l.b16 %v189
      %v258 = vunpack.c.l.b16 %v190
      %v259 = vunpack.c.l.b16 %v191
      %v260 = vunpack.c.l.b16 %v192
      %v261 = vunpack.c.l.b16 %v193
      %v262 = vunpack.c.l.b16 %v194
      %v263 = vunpack.c.l.b16 %v195
      %v264 = vunpack.c.l.b16 %v196
      %v265 = vunpack.c.l.b16 %v197
      %v266 = vunpack.c.l.b16 %v198
      %v267 = vunpack.c.l.b16 %v199
      %v268 = vunpack.c.l.b16 %v200
      %v269 = vunpack.c.l.b16 %v201
      %v270 = vunpack.c.l.b16 %v202
      %v271 = vunpack.c.l.b16 %v203
      %v272 = vunpack.c.l.b16 %v204
      %v273 = vunpack.c.l.b16 %v205
      %v274 = vunpack.c.l.b16 %v206
      %v275 = vunpack.c.l.b16 %v207
      %v276 = vunpack.c.l.b16 %v208
      %v277 = vunpack.c.l.b16 %v209
      %v278 = vunpack.c.l.b16 %v210
      %v279 = vunpack.c.l.b16 %v211
      %v280 = vunpack.c.l.b16 %v212
      %v281 = vunpack.c.l.b16 %v213
      %v282 = vunpack.c.l.b16 %v214
      %v283 = vunpack.c.l.b16 %v215
      %v284 = vunpack.c.l.b16 %v216
      %v285 = vpack.c.b16 %v254, %v253
      %v286 = vpack.c.b16 %v256, %v255
      %v287 = vpack.c.b16 %v258, %v257
      %v288 = vpack.c.b16 %v260, %v259
      %v289 = vpack.c.b16 %v262, %v261
      %v290 = vpack.c.b16 %v264, %v263
      %v291 = vpack.c.b16 %v266, %v265
      %v292 = vpack.c.b16 %v268, %v267
      %v293 = vpack.c.b16 %v270, %v269
      %v294 = vpack.c.b16 %v272, %v271
      %v295 = vpack.c.b16 %v274, %v273
      %v296 = vpack.c.b16 %v276, %v275
      %v297 = vpack.c.b16 %v278, %v277
      %v298 = vpack.c.b16 %v280, %v279
      %v299 = vpack.c.b16 %v282, %v281
      %v300 = vpack.c.b16 %v284, %v283
      %v305 = vunpack.c.l.b16 %v217
      %v306 = vunpack.c.l.b16 %v218
      %v307 = vunpack.c.l.b16 %v219
      %v308 = vunpack.c.l.b16 %v220
      %v309 = vpack.c.b16 %v306, %v305
      %v310 = vpack.c.b16 %v308, %v307
      %vm312 = vcmask 220160
      %v314 = vsel %vm312, %v285, 0
      %v317 = vsel %vm312, %v286, 0
      %v320 = vsel %vm312, %v287, 0
      %v323 = vsel %vm312, %v288, 0
      %v326 = vsel %vm312, %v289, 0
      %v329 = vsel %vm312, %v290, 0
      %v332 = vsel %vm312, %v291, 0
      %v335 = vsel %vm312, %v292, 0
      %v338 = vsel %vm312, %v293, 0
      %v341 = vsel %vm312, %v294, 0
      %v344 = vsel %vm312, %v295, 0
      %v347 = vsel %vm312, %v296, 0
      %v350 = vsel %vm312, %v297, 0
      %v353 = vsel %vm312, %v298, 0
      %v356 = vsel %vm312, %v299, 0
      %v359 = vsel %vm312, %v300, 0
      %vm361 = vcmask 1044480
      %vm362 = vcmask 1045504
      %v363 = vsel %vm361, 4294967295, 65535
      %v364 = vsel %vm362, %v363, 0
      %v366 = vand.u32 %v310, %v364
      %368 = vmatpush.bf16.msra.mxu0 0
      %369 = vmatpush.bf16.msra.mxu0 0
      %370 = vmatpush.bf16.msra.mxu0 0
      %371 = vmatpush.bf16.msra.mxu0 0
      %372 = vmatpush.bf16.msra.mxu0 0
      %373 = vmatpush.bf16.msra.mxu0 0
      %374 = vmatpush.bf16.msra.mxu0 %v366
      %375 = vmatpush.bf16.msra.mxu0 %v309
      %376 = vmatmul.bf16.gmra.mxu0 %v314
      %v377 = vpop.f32.mrf.mxu0
      %v378 = vadd.f32 0.0, %v377
      %v379 = vpop.f32.mrf.mxu0
      %v380 = vadd.f32 0.0, %v379
      %381 = vmatmul.bf16.gmra.mxu0 %v317
      %v382 = vpop.f32.mrf.mxu0
      %v383 = vadd.f32 0.0, %v382
      %v384 = vpop.f32.mrf.mxu0
      %v385 = vadd.f32 0.0, %v384
      %386 = vmatmul.bf16.gmra.mxu0 %v320
      %v387 = vpop.f32.mrf.mxu0
      %v388 = vadd.f32 0.0, %v387
      %v389 = vpop.f32.mrf.mxu0
      %v390 = vadd.f32 0.0, %v389
      %391 = vmatmul.bf16.gmra.mxu0 %v323
      %v392 = vpop.f32.mrf.mxu0
      %v393 = vadd.f32 0.0, %v392
      %v394 = vpop.f32.mrf.mxu0
      %v395 = vadd.f32 0.0, %v394
      %396 = vmatmul.bf16.gmra.mxu0 %v326
      %v397 = vpop.f32.mrf.mxu0
      %v398 = vadd.f32 0.0, %v397
      %v399 = vpop.f32.mrf.mxu0
      %v400 = vadd.f32 0.0, %v399
      %401 = vmatmul.bf16.gmra.mxu0 %v329
      %v402 = vpop.f32.mrf.mxu0
      %v403 = vadd.f32 0.0, %v402
      %v404 = vpop.f32.mrf.mxu0
      %v405 = vadd.f32 0.0, %v404
      %406 = vmatmul.bf16.gmra.mxu0 %v332
      %v407 = vpop.f32.mrf.mxu0
      %v408 = vadd.f32 0.0, %v407
      %v409 = vpop.f32.mrf.mxu0
      %v410 = vadd.f32 0.0, %v409
      %411 = vmatmul.bf16.gmra.mxu0 %v335
      %v412 = vpop.f32.mrf.mxu0
      %v413 = vadd.f32 0.0, %v412
      %v414 = vpop.f32.mrf.mxu0
      %v415 = vadd.f32 0.0, %v414
      %416 = vmatmul.bf16.gmra.mxu0 %v338
      %v417 = vpop.f32.mrf.mxu0
      %v418 = vadd.f32 0.0, %v417
      %v419 = vpop.f32.mrf.mxu0
      %v420 = vadd.f32 0.0, %v419
      %421 = vmatmul.bf16.gmra.mxu0 %v341
      %v422 = vpop.f32.mrf.mxu0
      %v423 = vadd.f32 0.0, %v422
      %v424 = vpop.f32.mrf.mxu0
      %v425 = vadd.f32 0.0, %v424
      %426 = vmatmul.bf16.gmra.mxu0 %v344
      %v427 = vpop.f32.mrf.mxu0
      %v428 = vadd.f32 0.0, %v427
      %v429 = vpop.f32.mrf.mxu0
      %v430 = vadd.f32 0.0, %v429
      %431 = vmatmul.bf16.gmra.mxu0 %v347
      %v432 = vpop.f32.mrf.mxu0
      %v433 = vadd.f32 0.0, %v432
      %v434 = vpop.f32.mrf.mxu0
      %v435 = vadd.f32 0.0, %v434
      %436 = vmatmul.bf16.gmra.mxu0 %v350
      %v437 = vpop.f32.mrf.mxu0
      %v438 = vadd.f32 0.0, %v437
      %v439 = vpop.f32.mrf.mxu0
      %v440 = vadd.f32 0.0, %v439
      %441 = vmatmul.bf16.gmra.mxu0 %v353
      %v442 = vpop.f32.mrf.mxu0
      %v443 = vadd.f32 0.0, %v442
      %v444 = vpop.f32.mrf.mxu0
      %v445 = vadd.f32 0.0, %v444
      %446 = vmatmul.bf16.gmra.mxu0 %v356
      %v447 = vpop.f32.mrf.mxu0
      %v448 = vadd.f32 0.0, %v447
      %v449 = vpop.f32.mrf.mxu0
      %v450 = vadd.f32 0.0, %v449
      %451 = vmatmul.bf16.gmra.mxu0 %v359
      %v452 = vpop.f32.mrf.mxu0
      %v453 = vadd.f32 0.0, %v452
      %v454 = vpop.f32.mrf.mxu0
      %v455 = vadd.f32 0.0, %v454
      %456 = vdwg.mxu0
      %v457 = vmax.f32 %v378, 0.0
      %v458 = vmax.f32 %v380, 0.0
      %v459 = vmax.f32 %v383, 0.0
      %v460 = vmax.f32 %v385, 0.0
      %v461 = vmax.f32 %v388, 0.0
      %v462 = vmax.f32 %v390, 0.0
      %v463 = vmax.f32 %v393, 0.0
      %v464 = vmax.f32 %v395, 0.0
      %v465 = vmax.f32 %v398, 0.0
      %v466 = vmax.f32 %v400, 0.0
      %v467 = vmax.f32 %v403, 0.0
      %v468 = vmax.f32 %v405, 0.0
      %v469 = vmax.f32 %v408, 0.0
      %v470 = vmax.f32 %v410, 0.0
      %v471 = vmax.f32 %v413, 0.0
      %v472 = vmax.f32 %v415, 0.0
      %v473 = vmax.f32 %v418, 0.0
      %v474 = vmax.f32 %v420, 0.0
      %v475 = vmax.f32 %v423, 0.0
      %v476 = vmax.f32 %v425, 0.0
      %v477 = vmax.f32 %v428, 0.0
      %v478 = vmax.f32 %v430, 0.0
      %v479 = vmax.f32 %v433, 0.0
      %v480 = vmax.f32 %v435, 0.0
      %v481 = vmax.f32 %v438, 0.0
      %v482 = vmax.f32 %v440, 0.0
      %v483 = vmax.f32 %v443, 0.0
      %v484 = vmax.f32 %v445, 0.0
      %v485 = vmax.f32 %v448, 0.0
      %v486 = vmax.f32 %v450, 0.0
      %v487 = vmax.f32 %v453, 0.0
      %v488 = vmax.f32 %v455, 0.0
      %v489 = vmin.f32 %v457, 6.0
      %v490 = vmin.f32 %v458, 6.0
      %v491 = vmin.f32 %v459, 6.0
      %v492 = vmin.f32 %v460, 6.0
      %v493 = vmin.f32 %v461, 6.0
      %v494 = vmin.f32 %v462, 6.0
      %v495 = vmin.f32 %v463, 6.0
      %v496 = vmin.f32 %v464, 6.0
      %v497 = vmin.f32 %v465, 6.0
      %v498 = vmin.f32 %v466, 6.0
      %v499 = vmin.f32 %v467, 6.0
      %v500 = vmin.f32 %v468, 6.0
      %v501 = vmin.f32 %v469, 6.0
      %v502 = vmin.f32 %v470, 6.0
      %v503 = vmin.f32 %v471, 6.0
      %v504 = vmin.f32 %v472, 6.0
      %v505 = vmin.f32 %v473, 6.0
      %v506 = vmin.f32 %v474, 6.0
      %v507 = vmin.f32 %v475, 6.0
      %v508 = vmin.f32 %v476, 6.0
      %v509 = vmin.f32 %v477, 6.0
      %v510 = vmin.f32 %v478, 6.0
      %v511 = vmin.f32 %v479, 6.0
      %v512 = vmin.f32 %v480, 6.0
      %v513 = vmin.f32 %v481, 6.0
      %v514 = vmin.f32 %v482, 6.0
      %v515 = vmin.f32 %v483, 6.0
      %v516 = vmin.f32 %v484, 6.0
      %v517 = vmin.f32 %v485, 6.0
      %v518 = vmin.f32 %v486, 6.0
      %v519 = vmin.f32 %v487, 6.0
      %v520 = vmin.f32 %v488, 6.0
      %v521 = vpack.c.bf16 %v489, %v489
      %v522 = vpack.c.bf16 %v490, %v490
      %v523 = vpack.c.bf16 %v491, %v491
      %v524 = vpack.c.bf16 %v492, %v492
      %v525 = vpack.c.bf16 %v493, %v493
      %v526 = vpack.c.bf16 %v494, %v494
      %v527 = vpack.c.bf16 %v495, %v495
      %v528 = vpack.c.bf16 %v496, %v496
      %v529 = vpack.c.bf16 %v497, %v497
      %v530 = vpack.c.bf16 %v498, %v498
      %v531 = vpack.c.bf16 %v499, %v499
      %v532 = vpack.c.bf16 %v500, %v500
      %v533 = vpack.c.bf16 %v501, %v501
      %v534 = vpack.c.bf16 %v502, %v502
      %v535 = vpack.c.bf16 %v503, %v503
      %v536 = vpack.c.bf16 %v504, %v504
      %v537 = vpack.c.bf16 %v505, %v505
      %v538 = vpack.c.bf16 %v506, %v506
      %v539 = vpack.c.bf16 %v507, %v507
      %v540 = vpack.c.bf16 %v508, %v508
      %v541 = vpack.c.bf16 %v509, %v509
      %v542 = vpack.c.bf16 %v510, %v510
      %v543 = vpack.c.bf16 %v511, %v511
      %v544 = vpack.c.bf16 %v512, %v512
      %v545 = vpack.c.bf16 %v513, %v513
      %v546 = vpack.c.bf16 %v514, %v514
      %v547 = vpack.c.bf16 %v515, %v515
      %v548 = vpack.c.bf16 %v516, %v516
      %v549 = vpack.c.bf16 %v517, %v517
      %v550 = vpack.c.bf16 %v518, %v518
      %v551 = vpack.c.bf16 %v519, %v519
      %v552 = vpack.c.bf16 %v520, %v520
      %vm553 = vcmask 257024
      %554 = vst.msk [vmem:[%s182] sm:$0xf] %vm553, %v521
      %555 = vst.msk [vmem:[%s182 + $0x4] sm:$0xf] %vm553, %v522
      %556 = vst.msk [vmem:[%s182 + $0x8] sm:$0xf] %vm553, %v523
      %557 = vst.msk [vmem:[%s182 + $0xc] sm:$0xf] %vm553, %v524
      %558 = vst.msk [vmem:[%s182 + $0x10] sm:$0xf] %vm553, %v525
      %559 = vst.msk [vmem:[%s182 + $0x14] sm:$0xf] %vm553, %v526
      %560 = vst.msk [vmem:[%s182 + $0x18] sm:$0xf] %vm553, %v527
      %561 = vst.msk [vmem:[%s182 + $0x1c] sm:$0xf] %vm553, %v528
      %562 = vst.msk [vmem:[%s182 + $0x20] sm:$0xf] %vm553, %v529
      %563 = vst.msk [vmem:[%s182 + $0x24] sm:$0xf] %vm553, %v530
      %564 = vst.msk [vmem:[%s182 + $0x28] sm:$0xf] %vm553, %v531
      %565 = vst.msk [vmem:[%s182 + $0x2c] sm:$0xf] %vm553, %v532
      %566 = vst.msk [vmem:[%s182 + $0x30] sm:$0xf] %vm553, %v533
      %567 = vst.msk [vmem:[%s182 + $0x34] sm:$0xf] %vm553, %v534
      %568 = vst.msk [vmem:[%s182 + $0x38] sm:$0xf] %vm553, %v535
      %569 = vst.msk [vmem:[%s182 + $0x3c] sm:$0xf] %vm553, %v536
      %570 = vst.msk [vmem:[%s182 + $0x40] sm:$0xf] %vm553, %v537
      %571 = vst.msk [vmem:[%s182 + $0x44] sm:$0xf] %vm553, %v538
      %572 = vst.msk [vmem:[%s182 + $0x48] sm:$0xf] %vm553, %v539
      %573 = vst.msk [vmem:[%s182 + $0x4c] sm:$0xf] %vm553, %v540
      %574 = vst.msk [vmem:[%s182 + $0x50] sm:$0xf] %vm553, %v541
      %575 = vst.msk [vmem:[%s182 + $0x54] sm:$0xf] %vm553, %v542
      %576 = vst.msk [vmem:[%s182 + $0x58] sm:$0xf] %vm553, %v543
      %577 = vst.msk [vmem:[%s182 + $0x5c] sm:$0xf] %vm553, %v544
      %578 = vst.msk [vmem:[%s182 + $0x60] sm:$0xf] %vm553, %v545
      %579 = vst.msk [vmem:[%s182 + $0x64] sm:$0xf] %vm553, %v546
      %580 = vst.msk [vmem:[%s182 + $0x68] sm:$0xf] %vm553, %v547
      %581 = vst.msk [vmem:[%s182 + $0x6c] sm:$0xf] %vm553, %v548
      %582 = vst.msk [vmem:[%s182 + $0x70] sm:$0xf] %vm553, %v549
      %583 = vst.msk [vmem:[%s182 + $0x74] sm:$0xf] %vm553, %v550
      %584 = vst.msk [vmem:[%s182 + $0x78] sm:$0xf] %vm553, %v551
      %585 = vst.msk [vmem:[%s182 + $0x7c] sm:$0xf] %vm553, %v552
      %s586 = smul.u32 32, %s17
      %p587 = scmp.lt.s32.totalorder %s586, 255
      %s588 = scalar_select %p587, %s586, 255
      %p589 = scmp.lt.s32.totalorder %s18, 0
      %s590 = scalar_select %p589, %s18, 0
      %s591 = sadd.s32 %s590, %s588
      %s592 = smul.addr %s591, 4
      %s593 = scalar_lea.vmem %s2, %s592
      // Predicated region
      $region29: #{tpu_custom_call.1} parent=27 // pred_check
        %p594 = pneg %p97
      $region30: #{tpu_custom_call.1} parent=27 // pred_check_branch
        %596 = sbr.rel (%p594) target = $region32
      $region31: #{tpu_custom_call.1} parent=27 // pred_region
        %s597 = smul.u32 32, %s17
      $region32: #{tpu_custom_call.1} parent=27 // pred_fallthru
        _
    $region28: #{tpu_custom_call.1} parent=5 // pred_fallthru
      _
    %p598 = scmp.le.s32.totalorder 2, %s8
    // Predicated region
    $region33: #{tpu_custom_call.1} parent=5 // pred_check
      %p599 = pneg %p598
    $region34: #{tpu_custom_call.1} parent=5 // pred_check_branch
      %601 = sbr.rel (%p599) target = $region36
    $region35: #{tpu_custom_call.1} parent=5 // pred_region
      %s602 = ssub.s32 %s8, 2
      // Predicated region
      $region37: #{tpu_custom_call.1} parent=35 // pred_check
        %p603 = pneg %p103
      $region38: #{tpu_custom_call.1} parent=35 // pred_check_branch
        %605 = sbr.rel (%p603) target = $region40
      $region39: #{tpu_custom_call.1} parent=35 // pred_region
        %s606 = smul.u32 32, %s19
        %p607 = scmp.lt.s32.totalorder %s606, 255
        %s608 = scalar_select %p607, %s606, 255
        %p609 = scmp.lt.s32.totalorder %s20, 0
        %s610 = scalar_select %p609, %s20, 0
        %s611 = sadd.s32 %s610, %s608
        %s612 = smul.addr %s611, 4
        %s613 = scalar_lea.vmem %s2, %s612
      $region40: #{tpu_custom_call.1} parent=35 // pred_fallthru
        _
    $region36: #{tpu_custom_call.1} parent=5 // pred_fallthru
      _
  $region6: #{tpu_custom_call.1} parent=0 // loop_footer
    %s12 = sadd.s32 1, %s8
  $region7: #{tpu_custom_call.1} parent=0 // loop_footer_branch
    %7 = sbr.rel target = $region3
  $region8: #{tpu_custom_call.1} parent=0 // loop_exit
    _

</llo_original>
